<compile_context>
chip_gen: v7x
topology: tpu7x:2x2x1
jax: 0.10.0
libtpu: 0.0.40
codegen_flags: <defaults>
</compile_context>

<pallas_src>
import functools

import jax
import jax.numpy as jnp
from jax import lax
from jax.experimental import pallas as pl
from jax.experimental.pallas import tpu as pltpu

_EPS = 1e-5  # nn.BatchNorm1d default


def _regressor_kernel(x_ref, gamma_ref, beta_ref, w_ref, b_ref, out_ref,
                      sum_ref, sumsq_ref, *, batch_size: int, eps: float):
    s = pl.program_id(0)       # feature-split index ("parallel" axis; one per TC on v7x)
    phase = pl.program_id(1)   # 0: batch statistics, 1: normalize + linear head
    t = pl.program_id(2)       # batch-tile index

    @pl.when(jnp.logical_and(phase == 0, t == 0))
    def _init():
        sum_ref[...] = jnp.zeros_like(sum_ref)
        sumsq_ref[...] = jnp.zeros_like(sumsq_ref)

    @pl.when(phase == 0)
    def _stats():
        x = x_ref[...].astype(jnp.float32)                        # (tile_b, d)
        sum_ref[...] += jnp.sum(x, axis=0, keepdims=True)         # (1, d) sublane reduce
        sumsq_ref[...] += jnp.sum(x * x, axis=0, keepdims=True)   # (1, d)
        # Keep the (revisited) output block deterministic during the stats pass.
        out_ref[...] = jnp.zeros_like(out_ref)

    @pl.when(phase == 1)
    def _apply():
        x = x_ref[...].astype(jnp.float32)                        # (tile_b, d)
        inv_n = 1.0 / batch_size
        mean = sum_ref[...] * inv_n                               # (1, d)
        # Biased variance via E[x^2] - E[x]^2 (avoids a third pass over x), clamped at 0.
        # Adequate in f32 for BN-scale activations; a 3-pass/compensated variant would be
        # needed only for |mean| >> std inputs.
        var = jnp.maximum(sumsq_ref[...] * inv_n - mean * mean, 0.0)
        inv_std = lax.rsqrt(var + eps)
        scale = gamma_ref[...] * inv_std                          # gamma folded into inv_std
        shift = beta_ref[...] - mean * scale                      # mean folded into shift
        y = jnp.maximum(x * scale + shift, 0.0)                   # BN + ReLU: 1 mul, 1 add, 1 max

        # Linear head, lane-dense: (8, d) . (tile_b, d)^T -> (8, tile_b); row 0 holds the
        # per-row dot products.  w is broadcast to 8 rows purely to keep the MXU operand
        # a standard full-sublane tile.
        w8 = jnp.broadcast_to(w_ref[...], (8, w_ref.shape[1]))
        prod = lax.dot_general(w8, y, (((1,), (1,)), ((), ())),
                               preferred_element_type=jnp.float32,
                               precision=lax.Precision.HIGHEST)
        bias = jnp.where(s == 0, b_ref[0], 0.0)   # add the bias exactly once across splits
        row = prod[0:1, :] + bias                                 # (1, tile_b)
        out_ref[...] = row.reshape(out_ref.shape).astype(out_ref.dtype)


def _choose_tile_b(batch: int, d_split: int) -> int:
    """Largest batch tile that divides B and keeps the double-buffered x tile small
    enough for v7x's 64 MiB VMEM (<= 8 MiB per buffer)."""
    budget_rows = max(8, (8 * 1024 * 1024) // (d_split * 4))
    for cand in (4096, 2048, 1024, 512, 256, 128):
        if cand <= budget_rows and batch % cand == 0:
            return cand
    # Fall back to a single full-batch tile (always a legal "full dim" block).
    # TODO(synk): very large ragged B (not a multiple of 128) is not tiled here; tiling it
    # would need masked tail handling in the statistics pass.
    return batch


def regressor_forward(x, gamma, beta, w, b, *, feature_splits: int = 1):
    """Regressor forward.  x: (B, D); gamma/beta: (D,); w: (1, D) or (D,); b: (1,).
    Returns (B,) float32.  feature_splits > 1 adds a leading "parallel" grid axis that
    splits the feature dim (useful on v7x's 2 TensorCores); requires D/splits % 128 == 0."""
    B, D = x.shape
    if D % feature_splits != 0:
        raise ValueError("feature_splits must divide latent_dim")
    d_split = D // feature_splits
    if feature_splits > 1 and d_split % 128 != 0:
        raise ValueError("per-split feature chunk must be a multiple of 128")

    gamma2 = jnp.asarray(gamma, jnp.float32).reshape(1, D)
    beta2 = jnp.asarray(beta, jnp.float32).reshape(1, D)
    w2 = jnp.asarray(w, jnp.float32).reshape(1, D)
    b1 = jnp.asarray(b, jnp.float32).reshape(1)

    tile_b = _choose_tile_b(B, d_split)
    nbt = B // tile_b
    grid = (feature_splits, 2, nbt)

    x_tile_bytes = tile_b * d_split * 4
    vmem_limit = int(min(112 * 2**20, max(32 * 2**20, 3 * x_tile_bytes + 8 * 2**20)))

    kernel = functools.partial(_regressor_kernel, batch_size=B, eps=_EPS)

    out3 = pl.pallas_call(
        kernel,
        out_shape=jax.ShapeDtypeStruct((feature_splits, 1, B), jnp.float32),
        grid=grid,
        in_specs=[
            pl.BlockSpec((tile_b, d_split), lambda s, p, t: (t, s)),   # x (re-read per phase)
            pl.BlockSpec((1, d_split), lambda s, p, t: (0, s)),        # BN gamma
            pl.BlockSpec((1, d_split), lambda s, p, t: (0, s)),        # BN beta
            pl.BlockSpec((1, d_split), lambda s, p, t: (0, s)),        # linear weight
            pl.BlockSpec(memory_space=pltpu.MemorySpace.SMEM),         # linear bias (scalar)
        ],
        out_specs=pl.BlockSpec((1, 1, tile_b), lambda s, p, t: (s, 0, t)),
        scratch_shapes=[
            pltpu.VMEM((1, d_split), jnp.float32),   # per-feature running sum
            pltpu.VMEM((1, d_split), jnp.float32),   # per-feature running sum of squares
        ],
        compiler_params=pltpu.CompilerParams(
            dimension_semantics=("parallel", "arbitrary", "arbitrary"),
            vmem_limit_bytes=vmem_limit,
        ),
    )(x, gamma2, beta2, w2, b1)

    # Combine per-split partial sums (bias already added once in-kernel) and squeeze.
    return jnp.sum(out3, axis=0)[0]


def reference_forward(x, gamma, beta, w, b):
    """Pure-JAX reference mirroring PyTorch training-mode forward (no MXU, exact f32)."""
    x = x.astype(jnp.float32)
    mean = jnp.mean(x, axis=0, keepdims=True)
    var = jnp.mean((x - mean) ** 2, axis=0, keepdims=True)  # biased, as in BN training
    y = (x - mean) / jnp.sqrt(var + _EPS) * gamma[None, :] + beta[None, :]
    y = jnp.maximum(y, 0.0)
    w2 = jnp.asarray(w, jnp.float32).reshape(1, -1)
    return jnp.sum(y * w2, axis=1) + jnp.asarray(b, jnp.float32).reshape(())


if __name__ == "__main__":
    key = jax.random.PRNGKey(0)

    cases = [
        dict(B=8, D=32, splits=1),     # tiny: single full-array tile (latent_dim=32)
        dict(B=384, D=32, splits=1),   # batch-tiled: tile_b=128, 3 tiles per phase
        dict(B=384, D=256, splits=2),  # feature-split ("parallel") axis + batch tiles
    ]
    for i, c in enumerate(cases):
        B, D, splits = c["B"], c["D"], c["splits"]
        k = jax.random.fold_in(key, i)
        kx, kw, kb, kg, kbe = jax.random.split(k, 5)
        x = jax.random.normal(kx, (B, D), dtype=jnp.float32)
        gamma = 1.0 + 0.1 * jax.random.normal(kg, (D,), dtype=jnp.float32)
        beta = 0.1 * jax.random.normal(kbe, (D,), dtype=jnp.float32)
        bound = 1.0 / (D ** 0.5)
        w = jax.random.uniform(kw, (1, D), minval=-bound, maxval=bound, dtype=jnp.float32)
        b = jax.random.uniform(kb, (1,), minval=-bound, maxval=bound, dtype=jnp.float32)

        out = jax.block_until_ready(
            regressor_forward(x, gamma, beta, w, b, feature_splits=splits))
        ref = reference_forward(x, gamma, beta, w, b)
        assert out.shape == (B,), out.shape
        err = jnp.max(jnp.abs(out - ref))
        assert jnp.allclose(out, ref, atol=1e-4, rtol=1e-4), (i, float(err))

    print("KERNEL_OK")
</pallas_src>

<mosaic_0001>
module attributes {stable_mosaic.version = 11 : i64} {
  func.func @_regressor_kernel(%arg0: i32, %arg1: i32, %arg2: i32, %arg3: memref<8x32xf32, #tpu.memory_space<vmem>>, %arg4: memref<1x32xf32, #tpu.memory_space<vmem>>, %arg5: memref<1x32xf32, #tpu.memory_space<vmem>>, %arg6: memref<1x32xf32, #tpu.memory_space<vmem>>, %arg7: memref<1xf32, #tpu.memory_space<smem>>, %arg8: memref<1x1x8xf32, #tpu.memory_space<vmem>>, %arg9: memref<1x32xf32, #tpu.memory_space<vmem>>, %arg10: memref<1x32xf32, #tpu.memory_space<vmem>>) attributes {dimension_semantics = [#tpu.dimension_semantics<parallel>, #tpu.dimension_semantics<arbitrary>, #tpu.dimension_semantics<arbitrary>], iteration_bounds = array<i64: 1, 2, 1>, scalar_prefetch = 0 : i64, scratch_operands = 2 : i64, tpu.core_type = #tpu.core_type<tc>, window_params = [{transform_indices = @transform_0, window_bounds = array<i64: 8, 32>}, {transform_indices = @transform_1, window_bounds = array<i64: 1, 32>}, {transform_indices = @transform_2, window_bounds = array<i64: 1, 32>}, {transform_indices = @transform_3, window_bounds = array<i64: 1, 32>}, {transform_indices = @transform_4, window_bounds = array<i64: 1>}, {transform_indices = @transform_5, window_bounds = array<i64: 1, 1, 8>}]} {
    %c0_i32 = arith.constant 0 : i32
    %0 = arith.cmpi eq, %arg1, %c0_i32 : i32
    %c0_i32_0 = arith.constant 0 : i32
    %1 = arith.cmpi eq, %arg2, %c0_i32_0 : i32
    %2 = arith.andi %0, %1 : i1
    %3 = arith.extui %2 : i1 to i32
    %c0_i32_1 = arith.constant 0 : i32
    %4 = arith.cmpi ne, %3, %c0_i32_1 : i32
    scf.if %4 {
      %cst = arith.constant 0.000000e+00 : f32
      %11 = vector.broadcast %cst : f32 to vector<1x32xf32>
      %c0 = arith.constant 0 : index
      %c0_5 = arith.constant 0 : index
      %12 = vector.load %arg9[%c0, %c0_5] : memref<1x32xf32, #tpu.memory_space<vmem>>, vector<1x32xf32>
      tpu.vector_store %arg9[%c0, %c0_5], %11 {strides = array<i32>} : memref<1x32xf32, #tpu.memory_space<vmem>>, vector<1x32xf32>,
      %cst_6 = arith.constant 0.000000e+00 : f32
      %13 = vector.broadcast %cst_6 : f32 to vector<1x32xf32>
      %c0_7 = arith.constant 0 : index
      %c0_8 = arith.constant 0 : index
      %14 = vector.load %arg10[%c0_7, %c0_8] : memref<1x32xf32, #tpu.memory_space<vmem>>, vector<1x32xf32>
      tpu.vector_store %arg10[%c0_7, %c0_8], %13 {strides = array<i32>} : memref<1x32xf32, #tpu.memory_space<vmem>>, vector<1x32xf32>,
    } else {
    }
    %c0_i32_2 = arith.constant 0 : i32
    %5 = arith.cmpi eq, %arg1, %c0_i32_2 : i32
    %6 = arith.extui %5 : i1 to i32
    %c0_i32_3 = arith.constant 0 : i32
    %7 = arith.cmpi ne, %6, %c0_i32_3 : i32
    scf.if %7 {
      %c0 = arith.constant 0 : index
      %c0_5 = arith.constant 0 : index
      %11 = vector.load %arg3[%c0, %c0_5] : memref<8x32xf32, #tpu.memory_space<vmem>>, vector<8x32xf32>
      %c0_6 = arith.constant 0 : index
      %c0_7 = arith.constant 0 : index
      %12 = vector.load %arg9[%c0_6, %c0_7] : memref<1x32xf32, #tpu.memory_space<vmem>>, vector<1x32xf32>
      %cst = arith.constant dense<0.000000e+00> : vector<32xf32>
      %13 = vector.multi_reduction <add>, %11, %cst [0] : vector<8x32xf32> to vector<32xf32>
      %14 = vector.shape_cast %13 : vector<32xf32> to vector<1x32xf32>
      %15 = arith.addf %12, %14 : vector<1x32xf32>
      %c0_8 = arith.constant 0 : index
      %c0_9 = arith.constant 0 : index
      %16 = vector.load %arg9[%c0_8, %c0_9] : memref<1x32xf32, #tpu.memory_space<vmem>>, vector<1x32xf32>
      tpu.vector_store %arg9[%c0_8, %c0_9], %15 {strides = array<i32>} : memref<1x32xf32, #tpu.memory_space<vmem>>, vector<1x32xf32>,
      %c0_10 = arith.constant 0 : index
      %c0_11 = arith.constant 0 : index
      %17 = vector.load %arg10[%c0_10, %c0_11] : memref<1x32xf32, #tpu.memory_space<vmem>>, vector<1x32xf32>
      %18 = arith.mulf %11, %11 : vector<8x32xf32>
      %cst_12 = arith.constant dense<0.000000e+00> : vector<32xf32>
      %19 = vector.multi_reduction <add>, %18, %cst_12 [0] : vector<8x32xf32> to vector<32xf32>
      %20 = vector.shape_cast %19 : vector<32xf32> to vector<1x32xf32>
      %21 = arith.addf %17, %20 : vector<1x32xf32>
      %c0_13 = arith.constant 0 : index
      %c0_14 = arith.constant 0 : index
      %22 = vector.load %arg10[%c0_13, %c0_14] : memref<1x32xf32, #tpu.memory_space<vmem>>, vector<1x32xf32>
      tpu.vector_store %arg10[%c0_13, %c0_14], %21 {strides = array<i32>} : memref<1x32xf32, #tpu.memory_space<vmem>>, vector<1x32xf32>,
      %cst_15 = arith.constant 0.000000e+00 : f32
      %23 = vector.broadcast %cst_15 : f32 to vector<1x1x8xf32>
      %c0_16 = arith.constant 0 : index
      %c0_17 = arith.constant 0 : index
      %c0_18 = arith.constant 0 : index
      %24 = vector.load %arg8[%c0_16, %c0_17, %c0_18] : memref<1x1x8xf32, #tpu.memory_space<vmem>>, vector<1x1x8xf32>
      tpu.vector_store %arg8[%c0_16, %c0_17, %c0_18], %23 {strides = array<i32>} : memref<1x1x8xf32, #tpu.memory_space<vmem>>, vector<1x1x8xf32>,
    } else {
    }
    %c1_i32 = arith.constant 1 : i32
    %8 = arith.cmpi eq, %arg1, %c1_i32 : i32
    %9 = arith.extui %8 : i1 to i32
    %c0_i32_4 = arith.constant 0 : i32
    %10 = arith.cmpi ne, %9, %c0_i32_4 : i32
    scf.if %10 {
      %c0 = arith.constant 0 : index
      %c0_5 = arith.constant 0 : index
      %11 = vector.load %arg3[%c0, %c0_5] : memref<8x32xf32, #tpu.memory_space<vmem>>, vector<8x32xf32>
      %c0_6 = arith.constant 0 : index
      %c0_7 = arith.constant 0 : index
      %12 = vector.load %arg9[%c0_6, %c0_7] : memref<1x32xf32, #tpu.memory_space<vmem>>, vector<1x32xf32>
      %cst = arith.constant 1.250000e-01 : f32
      %13 = vector.broadcast %cst : f32 to vector<1x32xf32>
      %14 = arith.mulf %12, %13 : vector<1x32xf32>
      %c0_8 = arith.constant 0 : index
      %c0_9 = arith.constant 0 : index
      %15 = vector.load %arg10[%c0_8, %c0_9] : memref<1x32xf32, #tpu.memory_space<vmem>>, vector<1x32xf32>
      %cst_10 = arith.constant 1.250000e-01 : f32
      %16 = vector.broadcast %cst_10 : f32 to vector<1x32xf32>
      %17 = arith.mulf %15, %16 : vector<1x32xf32>
      %18 = arith.mulf %14, %14 : vector<1x32xf32>
      %19 = arith.subf %17, %18 : vector<1x32xf32>
      %cst_11 = arith.constant 0.000000e+00 : f32
      %20 = vector.broadcast %cst_11 : f32 to vector<1x32xf32>
      %21 = arith.maximumf %19, %20 : vector<1x32xf32>
      %cst_12 = arith.constant 9.99999974E-6 : f32
      %22 = vector.broadcast %cst_12 : f32 to vector<1x32xf32>
      %23 = arith.addf %21, %22 : vector<1x32xf32>
      %24 = math.rsqrt %23 : vector<1x32xf32>
      %c0_13 = arith.constant 0 : index
      %c0_14 = arith.constant 0 : index
      %25 = vector.load %arg4[%c0_13, %c0_14] : memref<1x32xf32, #tpu.memory_space<vmem>>, vector<1x32xf32>
      %26 = arith.mulf %25, %24 : vector<1x32xf32>
      %c0_15 = arith.constant 0 : index
      %c0_16 = arith.constant 0 : index
      %27 = vector.load %arg5[%c0_15, %c0_16] : memref<1x32xf32, #tpu.memory_space<vmem>>, vector<1x32xf32>
      %28 = arith.mulf %14, %26 : vector<1x32xf32>
      %29 = arith.subf %27, %28 : vector<1x32xf32>
      %30 = vector.broadcast %26 : vector<1x32xf32> to vector<8x32xf32>
      %31 = arith.mulf %11, %30 : vector<8x32xf32>
      %32 = vector.broadcast %29 : vector<1x32xf32> to vector<8x32xf32>
      %33 = arith.addf %31, %32 : vector<8x32xf32>
      %cst_17 = arith.constant 0.000000e+00 : f32
      %34 = vector.broadcast %cst_17 : f32 to vector<8x32xf32>
      %35 = arith.maximumf %33, %34 : vector<8x32xf32>
      %c0_18 = arith.constant 0 : index
      %c0_19 = arith.constant 0 : index
      %36 = vector.load %arg6[%c0_18, %c0_19] : memref<1x32xf32, #tpu.memory_space<vmem>>, vector<1x32xf32>
      %37 = vector.shape_cast %36 : vector<1x32xf32> to vector<1x32xf32>
      %38 = vector.broadcast %37 : vector<1x32xf32> to vector<8x32xf32>
      %cst_20 = arith.constant dense<0.000000e+00> : vector<8x8xf32>
      %39 = tpu.matmul %38, %35, %cst_20 {dimension_numbers = #tpu.dot_dimension_numbers<[1], [1], [0], [0], [0, 0, 1, 0], [], []>, precision = #tpu.contract_precision<fp32>} : vector<8x32xf32>, vector<8x32xf32>, vector<8x8xf32> -> vector<8x8xf32>
      %c0_i32_21 = arith.constant 0 : i32
      %40 = arith.cmpi eq, %arg0, %c0_i32_21 : i32
      %c0_22 = arith.constant 0 : index
      %41 = memref.load %arg7[%c0_22] : memref<1xf32, #tpu.memory_space<smem>>
      %cst_23 = arith.constant 0.000000e+00 : f32
      %42 = arith.select %40, %41, %cst_23 : f32
      %43 = vector.extract_strided_slice %39 {offsets = [0, 0], sizes = [1, 8], strides = [1, 1]} : vector<8x8xf32> to vector<1x8xf32>
      %44 = vector.broadcast %42 : f32 to vector<1x8xf32>
      %45 = arith.addf %43, %44 : vector<1x8xf32>
      %46 = vector.shape_cast %45 : vector<1x8xf32> to vector<1x1x8xf32>
      %c0_24 = arith.constant 0 : index
      %c0_25 = arith.constant 0 : index
      %c0_26 = arith.constant 0 : index
      %47 = vector.load %arg8[%c0_24, %c0_25, %c0_26] : memref<1x1x8xf32, #tpu.memory_space<vmem>>, vector<1x1x8xf32>
      tpu.vector_store %arg8[%c0_24, %c0_25, %c0_26], %46 {strides = array<i32>} : memref<1x1x8xf32, #tpu.memory_space<vmem>>, vector<1x1x8xf32>,
    } else {
    }
    return
  }
  func.func @transform_0(%arg0: i32, %arg1: i32, %arg2: i32) -> (i32, i32) {
    %c0_i32 = arith.constant 0 : i32
    return %arg2, %arg0 : i32, i32
  }
  func.func @transform_1(%arg0: i32, %arg1: i32, %arg2: i32) -> (i32, i32) {
    %c0_i32 = arith.constant 0 : i32
    %c0_i32_0 = arith.constant 0 : i32
    return %c0_i32, %arg0 : i32, i32
  }
  func.func @transform_2(%arg0: i32, %arg1: i32, %arg2: i32) -> (i32, i32) {
    %c0_i32 = arith.constant 0 : i32
    %c0_i32_0 = arith.constant 0 : i32
    return %c0_i32, %arg0 : i32, i32
  }
  func.func @transform_3(%arg0: i32, %arg1: i32, %arg2: i32) -> (i32, i32) {
    %c0_i32 = arith.constant 0 : i32
    %c0_i32_0 = arith.constant 0 : i32
    return %c0_i32, %arg0 : i32, i32
  }
  func.func @transform_4(%arg0: i32, %arg1: i32, %arg2: i32) -> i32 {
    %c0_i32 = arith.constant 0 : i32
    %c0_i32_0 = arith.constant 0 : i32
    return %c0_i32 : i32
  }
  func.func @transform_5(%arg0: i32, %arg1: i32, %arg2: i32) -> (i32, i32, i32) {
    %c0_i32 = arith.constant 0 : i32
    %c0_i32_0 = arith.constant 0 : i32
    return %arg0, %c0_i32, %arg2 : i32, i32, i32
  }
}

</mosaic_0001>

<llo_original>
// kernel: tpu_custom_call.1
$region0: #{tpu_custom_call.1}
  #allocation0 [shape = 'u32[]', space=smem, size = 0x4, offset = 0x4, fixed_abs, tag = 'smem constant byte address 0x4 - core index']
  #allocation1 [shape = 'u32[144,128]{1,0:T(1,128)}', space=vmem, size = 0x12000, scoped, tag = 'internal scratch']
  #allocation2 [shape = 'f32[1,32]{1,0:T(1,128)}', space=vmem, size = 0x200, scoped, tag = 'scratch operand']
  #allocation3 [shape = 'f32[1,32]{1,0:T(1,128)}', space=vmem, size = 0x200, scoped, tag = 'scratch operand']
  #allocation4 [shape = 'f32[1]{0:T(128)S(6)}', space=smem, size = 0x200, scoped, tag = 'scoped memory for tpu_custom_call.1']
  %s0 = inlined_call_operand.hbm [shape: f32[8,32], index: 0, kind: input, shape index: {}]
  %s1 = inlined_call_operand.vmem [shape: f32[1,32], index: 1, kind: input, shape index: {}]
  %s2 = inlined_call_operand.vmem [shape: f32[1,32], index: 2, kind: input, shape index: {}]
  %s3 = inlined_call_operand.vmem [shape: f32[1,32], index: 3, kind: input, shape index: {}]
  %s4 = inlined_call_operand.<no memory space> [shape: f32[1], index: 4, kind: input, shape index: {}]
  %s5 = inlined_call_operand.hbm [shape: f32[1,1,8], index: 5, kind: output, shape index: {}]
  %s6 = sld [smem:[#allocation0]]
  $region69: #{tpu_custom_call.1} parent=0
    _
  %s8 = ssub.s32 1, %s6
  %s9 = scalar_select 0, %s8, %s6
  %10 = sst [smem:[#allocation4]] %s4
  $region1: #{tpu_custom_call.1} parent=0
    #allocation5 [shape = 'u8[4096]{0}', space=vmem, size = 0x1000, scoped, tag = 'input window, operand 0, single buffered']
    #allocation6 [shape = 's32[2]{0}', space=sflag, size = 0x8, scoped, tag = 'scoped memory for tpu_custom_call.1']
    #allocation7 [shape = 's32[2]{0}', space=sflag, size = 0x8, scoped, tag = 'scoped memory for tpu_custom_call.1']
    #allocation8 [shape = 'u8[512]{0}', space=vmem, size = 0x400, scoped, tag = 'output window, operand 0, single buffered']
    %11 = vsyncpa [#allocation6], 0
    %12 = vsyncpa [#allocation7], 0
    loop: start=0, step=1, limit=4
    $region2: #{tpu_custom_call.1} parent=1 // loop_pre_header
      _
    $region3: #{tpu_custom_call.1} parent=1 // loop_header
      %s14 = sphi 0, %s18
      %p15 = scmp.ge.s32.totalorder %s14, 4
      %s21 = sphi 0, %s40
      %s22 = sphi 0, %s36
      %s23 = sphi 0, %s32
      %s24 = sphi 0, %s21
      %s25 = sphi 0, %s22
      %s26 = sphi 0, %s23
      %s27 = sphi 0, %s24
      %s28 = sphi 0, %s25
      %s29 = sphi 0, %s26
      %s45 = sphi 0, %s47
      %s48 = sphi 0, %s45
      %s49 = sphi 0, %s48
      %s65 = sphi 0, %s49
      %s71 = sphi 0, %s73
      %s74 = sphi 0, %s71
      %s75 = sphi 0, %s74
      %s91 = sphi 0, %s75
      %s97 = sphi 0, %s99
      %s100 = sphi 0, %s97
      %s101 = sphi 0, %s100
      %s117 = sphi 0, %s101
      %s123 = sphi 0, %s125
      %s126 = sphi 0, %s123
      %s127 = sphi 0, %s126
      %s143 = sphi 0, %s127
      %s147 = sphi 0, %s147
      %s149 = sphi 0, %s147
      %s150 = sphi 0, %s149
      %s164 = sphi 0, %s150
      %s172 = sphi 0, %s174
      %s175 = sphi 0, %s172
      %s176 = sphi 0, %s175
      %s192 = sphi 0, %s176
    $region4: #{tpu_custom_call.1} parent=1 // loop_header_branch
      %17 = sbr.rel (%p15) target = $region8
    $region5: #{tpu_custom_call.1} parent=1 // loop_body
      %s19 = ssub.s32 %s14, 1
      %s20 = ssub.s32 %s14, 2
      %s30 = sadd.s32 1, %s23
      %p31 = scmp.ge.s32.totalorder %s30, 1
      %s32 = scalar_select %p31, 0, %s30
      %s33 = sadd.s32 1, %s22
      %s34 = scalar_select %p31, %s33, %s22
      %p35 = scmp.ge.s32.totalorder %s34, 2
      %s36 = scalar_select %p35, 0, %s34
      %s37 = sadd.s32 1, %s21
      %s38 = scalar_select %p35, %s37, %s21
      %p39 = scmp.ge.s32.totalorder %s38, 1
      %s40 = scalar_select %p39, 0, %s38
      %s41 = ssub.s32 %s23, %s32
      %s42 = ssub.s32 %s21, %s40
      %s43 = sor.u32 %s41, %s42
      %p44 = scmp.eq.s32.totalorder %s43, 0
      %s46 = sadd.s32 %s45, 1
      %s47 = scalar_select %p44, %s45, %s46
      %p50 = pneg %p44
      %p51 = scmp.eq.s32.totalorder %s14, 1
      %p52 = por %p50, %p51
      %p53 = scmp.ne.s32.totalorder %s45, %s48
      %p54 = scmp.eq.s32.totalorder %s14, 0
      %p55 = por %p53, %p54
      %p56 = scmp.ne.s32.totalorder %s45, %s48
      %p57 = scmp.eq.s32.totalorder %s19, 1
      %p58 = por %p56, %p57
      %p59 = scmp.ne.s32.totalorder %s48, %s49
      %p60 = scmp.eq.s32.totalorder %s19, 0
      %p61 = por %p59, %p60
      %p62 = scmp.ne.s32.totalorder %s48, %s49
      %p63 = scmp.eq.s32.totalorder %s20, 1
      %p64 = por %p62, %p63
      %p66 = scmp.ne.s32.totalorder %s49, %s65
      %p67 = scmp.eq.s32.totalorder %s20, 0
      %p68 = por %p66, %p67
      %s69 = ssub.s32 %s21, %s40
      %p70 = scmp.eq.s32.totalorder %s69, 0
      %s72 = sadd.s32 %s71, 1
      %s73 = scalar_select %p70, %s71, %s72
      %p76 = pneg %p70
      %p77 = scmp.eq.s32.totalorder %s14, 1
      %p78 = por %p76, %p77
      %p79 = scmp.ne.s32.totalorder %s71, %s74
      %p80 = scmp.eq.s32.totalorder %s14, 0
      %p81 = por %p79, %p80
      %p82 = scmp.ne.s32.totalorder %s71, %s74
      %p83 = scmp.eq.s32.totalorder %s19, 1
      %p84 = por %p82, %p83
      %p85 = scmp.ne.s32.totalorder %s74, %s75
      %p86 = scmp.eq.s32.totalorder %s19, 0
      %p87 = por %p85, %p86
      %p88 = scmp.ne.s32.totalorder %s74, %s75
      %p89 = scmp.eq.s32.totalorder %s20, 1
      %p90 = por %p88, %p89
      %p92 = scmp.ne.s32.totalorder %s75, %s91
      %p93 = scmp.eq.s32.totalorder %s20, 0
      %p94 = por %p92, %p93
      %s95 = ssub.s32 %s21, %s40
      %p96 = scmp.eq.s32.totalorder %s95, 0
      %s98 = sadd.s32 %s97, 1
      %s99 = scalar_select %p96, %s97, %s98
      %p102 = pneg %p96
      %p103 = scmp.eq.s32.totalorder %s14, 1
      %p104 = por %p102, %p103
      %p105 = scmp.ne.s32.totalorder %s97, %s100
      %p106 = scmp.eq.s32.totalorder %s14, 0
      %p107 = por %p105, %p106
      %p108 = scmp.ne.s32.totalorder %s97, %s100
      %p109 = scmp.eq.s32.totalorder %s19, 1
      %p110 = por %p108, %p109
      %p111 = scmp.ne.s32.totalorder %s100, %s101
      %p112 = scmp.eq.s32.totalorder %s19, 0
      %p113 = por %p111, %p112
      %p114 = scmp.ne.s32.totalorder %s100, %s101
      %p115 = scmp.eq.s32.totalorder %s20, 1
      %p116 = por %p114, %p115
      %p118 = scmp.ne.s32.totalorder %s101, %s117
      %p119 = scmp.eq.s32.totalorder %s20, 0
      %p120 = por %p118, %p119
      %s121 = ssub.s32 %s21, %s40
      %p122 = scmp.eq.s32.totalorder %s121, 0
      %s124 = sadd.s32 %s123, 1
      %s125 = scalar_select %p122, %s123, %s124
      %p128 = pneg %p122
      %p129 = scmp.eq.s32.totalorder %s14, 1
      %p130 = por %p128, %p129
      %p131 = scmp.ne.s32.totalorder %s123, %s126
      %p132 = scmp.eq.s32.totalorder %s14, 0
      %p133 = por %p131, %p132
      %p134 = scmp.ne.s32.totalorder %s123, %s126
      %p135 = scmp.eq.s32.totalorder %s19, 1
      %p136 = por %p134, %p135
      %p137 = scmp.ne.s32.totalorder %s126, %s127
      %p138 = scmp.eq.s32.totalorder %s19, 0
      %p139 = por %p137, %p138
      %p140 = scmp.ne.s32.totalorder %s126, %s127
      %p141 = scmp.eq.s32.totalorder %s20, 1
      %p142 = por %p140, %p141
      %p144 = scmp.ne.s32.totalorder %s127, %s143
      %p145 = scmp.eq.s32.totalorder %s20, 0
      %p146 = por %p144, %p145
      %s148 = sadd.s32 %s147, 1
      %p151 = scmp.eq.s32.totalorder %s14, 1
      %p152 = scmp.ne.s32.totalorder %s147, %s149
      %p153 = scmp.eq.s32.totalorder %s14, 0
      %p154 = por %p152, %p153
      %p155 = scmp.ne.s32.totalorder %s147, %s149
      %p156 = scmp.eq.s32.totalorder %s19, 1
      %p157 = por %p155, %p156
      %p158 = scmp.ne.s32.totalorder %s149, %s150
      %p159 = scmp.eq.s32.totalorder %s19, 0
      %p160 = por %p158, %p159
      %p161 = scmp.ne.s32.totalorder %s149, %s150
      %p162 = scmp.eq.s32.totalorder %s20, 1
      %p163 = por %p161, %p162
      %p165 = scmp.ne.s32.totalorder %s150, %s164
      %p166 = scmp.eq.s32.totalorder %s20, 0
      %p167 = por %p165, %p166
      %s168 = ssub.s32 %s21, %s40
      %s169 = ssub.s32 %s23, %s32
      %s170 = sor.u32 %s168, %s169
      %p171 = scmp.eq.s32.totalorder %s170, 0
      %s173 = sadd.s32 %s172, 1
      %s174 = scalar_select %p171, %s172, %s173
      %p177 = pneg %p171
      %p178 = scmp.eq.s32.totalorder %s14, 1
      %p179 = por %p177, %p178
      %p180 = scmp.ne.s32.totalorder %s172, %s175
      %p181 = scmp.eq.s32.totalorder %s14, 0
      %p182 = por %p180, %p181
      %p183 = scmp.ne.s32.totalorder %s172, %s175
      %p184 = scmp.eq.s32.totalorder %s19, 1
      %p185 = por %p183, %p184
      %p186 = scmp.ne.s32.totalorder %s175, %s176
      %p187 = scmp.eq.s32.totalorder %s19, 0
      %p188 = por %p186, %p187
      %p189 = scmp.ne.s32.totalorder %s175, %s176
      %p190 = scmp.eq.s32.totalorder %s20, 1
      %p191 = por %p189, %p190
      %p193 = scmp.ne.s32.totalorder %s176, %s192
      %p194 = scmp.eq.s32.totalorder %s20, 0
      %p195 = por %p193, %p194
      %p196 = scmp.le.s32.totalorder 1, %s14
      %p197 = scmp.lt.s32.totalorder %s14, 3
      %p198 = pnand %p196, %p197
      %p199 = pneg %p198
      // Predicated region
      $region9: #{tpu_custom_call.1} parent=5 // pred_check
        _
      $region10: #{tpu_custom_call.1} parent=5 // pred_check_branch
        %201 = sbr.rel (%p198) target = $region12
      $region11: #{tpu_custom_call.1} parent=5 // pred_region
        %s202 = ssub.s32 %s14, 1
        // Predicated region
        $region13: #{tpu_custom_call.1} parent=11 // pred_check
          %p203 = pneg %p61
        $region14: #{tpu_custom_call.1} parent=11 // pred_check_branch
          %205 = sbr.rel (%p203) target = $region16
        $region15: #{tpu_custom_call.1} parent=11 // pred_region
          %s207 = ssub.s32 128, 128
          %208 = vsyncadd [#allocation6], %s207
          %s209 = sadd.s32 %s24, %s26
          %s210 = smul.addr %s209, 128
          %s211 = scalar_lea.hbm %s0, %s210
          %s213 = sshll.u32 [#allocation5], 4
          %s214 = int_to_ptr.vmem [resolvable:$true] %s213
          %216 = dma.hbm_to_vmem [thread:$0]  %s211, 128, %s214, [#allocation6]
        $region16: #{tpu_custom_call.1} parent=11 // pred_fallthru
          _
        // Predicated region
        $region17: #{tpu_custom_call.1} parent=11 // pred_check
          %p217 = pneg %p87
        $region18: #{tpu_custom_call.1} parent=11 // pred_check_branch
          %219 = sbr.rel (%p217) target = $region20
        $region19: #{tpu_custom_call.1} parent=11 // pred_region
          %p220 = scmp.lt.s32.totalorder %s24, 0
          %s221 = scalar_select %p220, %s24, 0
          %s222 = scalar_lea.vmem %s1, %s221
        $region20: #{tpu_custom_call.1} parent=11 // pred_fallthru
          _
        // Predicated region
        $region21: #{tpu_custom_call.1} parent=11 // pred_check
          %p223 = pneg %p113
        $region22: #{tpu_custom_call.1} parent=11 // pred_check_branch
          %225 = sbr.rel (%p223) target = $region24
        $region23: #{tpu_custom_call.1} parent=11 // pred_region
          %p226 = scmp.lt.s32.totalorder %s24, 0
          %s227 = scalar_select %p226, %s24, 0
          %s228 = scalar_lea.vmem %s2, %s227
        $region24: #{tpu_custom_call.1} parent=11 // pred_fallthru
          _
        // Predicated region
        $region25: #{tpu_custom_call.1} parent=11 // pred_check
          %p229 = pneg %p139
        $region26: #{tpu_custom_call.1} parent=11 // pred_check_branch
          %231 = sbr.rel (%p229) target = $region28
        $region27: #{tpu_custom_call.1} parent=11 // pred_region
          %p232 = scmp.lt.s32.totalorder %s24, 0
          %s233 = scalar_select %p232, %s24, 0
          %s234 = scalar_lea.vmem %s3, %s233
        $region28: #{tpu_custom_call.1} parent=11 // pred_fallthru
          _
        // Predicated region
        $region29: #{tpu_custom_call.1} parent=11 // pred_check
          %p235 = pneg %p160
        $region30: #{tpu_custom_call.1} parent=11 // pred_check_branch
          %237 = sbr.rel (%p235) target = $region32
        $region31: #{tpu_custom_call.1} parent=11 // pred_region
          _
        $region32: #{tpu_custom_call.1} parent=11 // pred_fallthru
          _
      $region12: #{tpu_custom_call.1} parent=5 // pred_fallthru
        _
      %p238 = scmp.lt.s32.totalorder %s14, 2
      // Predicated region
      $region33: #{tpu_custom_call.1} parent=5 // pred_check
        %p239 = pneg %p238
      $region34: #{tpu_custom_call.1} parent=5 // pred_check_branch
        %241 = sbr.rel (%p239) target = $region36
      $region35: #{tpu_custom_call.1} parent=5 // pred_region
        _
      $region36: #{tpu_custom_call.1} parent=5 // pred_fallthru
        _
      %p242 = scmp.le.s32.totalorder 1, %s14
      %p243 = scmp.lt.s32.totalorder %s14, 3
      %p244 = pnand %p242, %p243
      %p245 = pneg %p244
      // Predicated region
      $region37: #{tpu_custom_call.1} parent=5 // pred_check
        _
      $region38: #{tpu_custom_call.1} parent=5 // pred_check_branch
        %247 = sbr.rel (%p244) target = $region40
      $region39: #{tpu_custom_call.1} parent=5 // pred_region
        %s248 = ssub.s32 %s14, 1
        // Predicated region
        $region41: #{tpu_custom_call.1} parent=39 // pred_check
          %p249 = pneg %p61
        $region42: #{tpu_custom_call.1} parent=39 // pred_check_branch
          %251 = sbr.rel (%p249) target = $region44
        $region43: #{tpu_custom_call.1} parent=39 // pred_region
          %252 = dma.done [#allocation6], 128
        $region44: #{tpu_custom_call.1} parent=39 // pred_fallthru
          _
        %p253 = pneg %p61
        %p254 = pneg %p58
        %p255 = scmp.lt.s32.totalorder %s24, 0
        %s256 = scalar_select %p255, %s24, 0
        %s257 = scalar_lea.vmem %s1, %s256
        %p258 = pneg %p87
        %p259 = pneg %p84
        %p260 = scmp.lt.s32.totalorder %s24, 0
        %s261 = scalar_select %p260, %s24, 0
        %s262 = scalar_lea.vmem %s2, %s261
        %p263 = pneg %p113
        %p264 = pneg %p110
        %p265 = scmp.lt.s32.totalorder %s24, 0
        %s266 = scalar_select %p265, %s24, 0
        %s267 = scalar_lea.vmem %s3, %s266
        %p268 = pneg %p139
        %p269 = pneg %p136
        %p270 = pneg %p160
        %p271 = pneg %p157
        %p272 = pneg %p188
        %p273 = pneg %p185
        %p274 = scmp.lt.s32.totalorder %s24, 0
        %s275 = scalar_select %p274, %s24, 0
        %s276 = scalar_lea.vmem %s1, %s275
        %p277 = scmp.lt.s32.totalorder %s24, 0
        %s278 = scalar_select %p277, %s24, 0
        %s279 = scalar_lea.vmem %s2, %s278
        %p280 = scmp.lt.s32.totalorder %s24, 0
        %s281 = scalar_select %p280, %s24, 0
        %s282 = scalar_lea.vmem %s3, %s281
        %p283 = scmp.eq.s32.totalorder %s25, 0
        %p284 = scmp.eq.s32.totalorder %s26, 0
        %p285 = pnand %p283, %p284
        %p286 = pneg %p285
        // Predicated region
        $region45: #{tpu_custom_call.1} parent=39 // pred_check
          _
        $region46: #{tpu_custom_call.1} parent=39 // pred_check_branch
          %288 = sbr.rel (%p285) target = $region48
        $region47: #{tpu_custom_call.1} parent=39 // pred_region
          %vm289 = vcmask 253952
          %290 = vst.msk [vmem:[#allocation2] sm:$0x1] %vm289, 0.0
          %291 = vst.msk [vmem:[#allocation3] sm:$0x1] %vm289, 0.0
        $region48: #{tpu_custom_call.1} parent=39 // pred_fallthru
          _
        // Predicated region
        $region49: #{tpu_custom_call.1} parent=39 // pred_check
          %p292 = pneg %p283
        $region50: #{tpu_custom_call.1} parent=39 // pred_check_branch
          %294 = sbr.rel (%p292) target = $region52
        $region51: #{tpu_custom_call.1} parent=39 // pred_region
          %v295 = vld [vmem:[#allocation5] sm:$0xff]
          %v296 = vld [vmem:[#allocation2] sm:$0x1]
          %vm297 = vcmask 261120
          %v298 = vsel %vm297, %v295, 0.0
          %v299 = vrot.slane %v298, 4
          %v300 = vadd.f32 %v298, %v299
          %v301 = vrot.slane %v300, 2
          %v302 = vadd.f32 %v300, %v301
          %v303 = vrot.slane %v302, 1
          %v304 = vadd.f32 %v302, %v303
          %v305 = vadd.f32 %v296, %v304
          %vm306 = vcmask 253952
          %307 = vst.msk [vmem:[#allocation2] sm:$0x1] %vm306, %v305
          %v308 = vld [vmem:[#allocation3] sm:$0x1]
          %v309 = vmul.f32 %v295, %v295
          %v310 = vsel %vm297, %v309, 0.0
          %v311 = vrot.slane %v310, 4
          %v312 = vadd.f32 %v310, %v311
          %v313 = vrot.slane %v312, 2
          %v314 = vadd.f32 %v312, %v313
          %v315 = vrot.slane %v314, 1
          %v316 = vadd.f32 %v314, %v315
          %v317 = vadd.f32 %v308, %v316
          %318 = vst.msk [vmem:[#allocation3] sm:$0x1] %vm306, %v317
          %vm319 = vcmask 57344
          %320 = vst.msk [vmem:[#allocation8] sm:$0x1] %vm319, 0.0
        $region52: #{tpu_custom_call.1} parent=39 // pred_fallthru
          _
        %p321 = scmp.eq.s32.totalorder %s25, 1
        // Predicated region
        $region53: #{tpu_custom_call.1} parent=39 // pred_check
          %p322 = pneg %p321
        $region54: #{tpu_custom_call.1} parent=39 // pred_check_branch
          %324 = sbr.rel (%p322) target = $region56
        $region55: #{tpu_custom_call.1} parent=39 // pred_region
          %v325 = vld [vmem:[#allocation5] sm:$0xff]
          %v326 = vld [vmem:[#allocation2] sm:$0x1]
          %v327 = vmul.f32 %v326, 0.125
          %v328 = vld [vmem:[#allocation3] sm:$0x1]
          %v329 = vmul.f32 %v328, 0.125
          %v330 = vmul.f32 %v327, %v327
          %v331 = vsub.f32 %v329, %v330
          %v332 = vmax.f32 %v331, 0.0
          %v333 = vadd.f32 %v332, 1e-05
          %v334 = vrsqrt.pop %v333
          %v335 = vld [vmem:[%s276] sm:$0x1]
          %v336 = vmul.f32 %v335, %v334
          %v337 = vld [vmem:[%s279] sm:$0x1]
          %v338 = vmul.f32 %v327, %v336
          %v339 = vsub.f32 %v337, %v338
          %v341 = vlaneseq
          %v342 = vshrl.u32 %v341, 7
          %v343 = vsub.s32 0, %v342
          %v344 = vrot.slane %v336, %v343
          %v346 = vmul.f32 %v325, %v344
          %v348 = vlaneseq
          %v349 = vshrl.u32 %v348, 7
          %v350 = vsub.s32 0, %v349
          %v351 = vrot.slane %v339, %v350
          %v353 = vadd.f32 %v346, %v351
          %v354 = vmax.f32 %v353, 0.0
          %v355 = vld [vmem:[%s282] sm:$0x1]
          %v357 = vlaneseq
          %v358 = vshrl.u32 %v357, 7
          %v359 = vsub.s32 0, %v358
          %v360 = vrot.slane %v355, %v359
          %vm361 = vcmask 261120
          %v362 = vsel %vm361, %v360, 0
          %v365 = vsel %vm361, %v354, 0
          %367 = vmatprep.subr.mxu0 0.0
          %v368 = vand.u32 %v365, 4294901760
          %369 = vmatpush1.xpose.msra.mxu0 %v368
          %370 = vmatprep.subr.mxu0 0.0
          %371 = vmatpush1.xpose.msra.mxu0 0.0
          %372 = vmatprep.subr.mxu0 0.0
          %373 = vmatpush1.xpose.msra.mxu0 0.0
          %374 = vmatprep.subr.mxu0 0.0
          %375 = vmatpush1.xpose.msra.mxu0 0.0
          %376 = vmatprep.subr.mxu0 0.0
          %377 = vmatpush1.xpose.msra.mxu0 0.0
          %378 = vmatprep.subr.mxu0 0.0
          %379 = vmatpush1.xpose.msra.mxu0 0.0
          %380 = vmatprep.subr.mxu0 0.0
          %381 = vmatpush1.xpose.msra.mxu0 0.0
          %382 = vmatprep.subr.mxu0 0.0
          %383 = vmatpush1.xpose.msra.mxu0 0.0
          %384 = vmatprep.subr.mxu0 0.0
          %385 = vmatpush1.xpose.msra.mxu0 0.0
          %386 = vmatprep.subr.mxu0 0.0
          %387 = vmatpush1.xpose.msra.mxu0 0.0
          %388 = vmatprep.subr.mxu0 0.0
          %389 = vmatpush1.xpose.msra.mxu0 0.0
          %390 = vmatprep.subr.mxu0 0.0
          %391 = vmatpush1.xpose.msra.mxu0 0.0
          %392 = vmatprep.subr.mxu0 0.0
          %393 = vmatpush1.xpose.msra.mxu0 0.0
          %394 = vmatprep.subr.mxu0 0.0
          %395 = vmatpush1.xpose.msra.mxu0 0.0
          %396 = vmatprep.subr.mxu0 0.0
          %397 = vmatpush1.xpose.msra.mxu0 0.0
          %398 = vmatprep.subr.mxu0 0.0
          %399 = vmatpush1.xpose.msra.mxu0 0.0
          %400 = vmatprep.subr.mxu0 0.0
          %401 = vmatpush1.xpose.msra.mxu0 0.0
          %402 = vmatprep.subr.mxu0 0.0
          %403 = vmatpush1.xpose.msra.mxu0 0.0
          %404 = vmatprep.subr.mxu0 0.0
          %405 = vmatpush1.xpose.msra.mxu0 0.0
          %406 = vmatprep.subr.mxu0 0.0
          %407 = vmatpush1.xpose.msra.mxu0 0.0
          %408 = vmatprep.subr.mxu0 0.0
          %409 = vmatpush1.xpose.msra.mxu0 0.0
          %410 = vmatprep.subr.mxu0 0.0
          %411 = vmatpush1.xpose.msra.mxu0 0.0
          %412 = vmatprep.subr.mxu0 0.0
          %413 = vmatpush1.xpose.msra.mxu0 0.0
          %414 = vmatprep.subr.mxu0 0.0
          %415 = vmatpush1.xpose.msra.mxu0 0.0
          %416 = vmatprep.subr.mxu0 0.0
          %417 = vmatpush1.xpose.msra.mxu0 0.0
          %418 = vmatprep.subr.mxu0 0.0
          %419 = vmatpush1.xpose.msra.mxu0 0.0
          %420 = vmatprep.subr.mxu0 0.0
          %421 = vmatpush1.xpose.msra.mxu0 0.0
          %422 = vmatprep.subr.mxu0 0.0
          %423 = vmatpush1.xpose.msra.mxu0 0.0
          %424 = vmatprep.subr.mxu0 0.0
          %425 = vmatpush1.xpose.msra.mxu0 0.0
          %426 = vmatprep.subr.mxu0 0.0
          %427 = vmatpush1.xpose.msra.mxu0 0.0
          %428 = vmatprep.subr.mxu0 0.0
          %429 = vmatpush1.xpose.msra.mxu0 0.0
          %430 = vmatprep.subr.mxu0 0.0
          %431 = vmatpush1.xpose.msra.mxu0 0.0
          %432 = vmatprep.mubr.f32.mxu0 0.0
          %v433 = vand.u32 %v362, 4294901760
          %v434 = vsub.f32 %v362, %v433
          %v435 = vand.u32 %v434, 4294901760
          %v436 = vsub.f32 %v434, %v435
          %v437 = vand.u32 %v436, 4294901760
          %438 = vmatmul.mubr.f32.gmra.mrb[0].mxu0 %v437
          %v439 = vpop.f32.mrb[0].mxu0
          %v440 = vadd.f32 0.0, %v439
          %v441 = vpop.f32.mrb[0].mxu0
          %442 = vdwg.mxu0
          %443 = vmatprep.subr.mxu0 0.0
          %v444 = vand.u32 %v365, 4294901760
          %v445 = vsub.f32 %v365, %v444
          %v446 = vand.u32 %v445, 4294901760
          %v447 = vsub.f32 %v445, %v446
          %v448 = vand.u32 %v447, 4294901760
          %449 = vmatpush1.xpose.msra.mxu0 %v448
          %450 = vmatprep.subr.mxu0 0.0
          %451 = vmatpush1.xpose.msra.mxu0 0.0
          %452 = vmatprep.subr.mxu0 0.0
          %453 = vmatpush1.xpose.msra.mxu0 0.0
          %454 = vmatprep.subr.mxu0 0.0
          %455 = vmatpush1.xpose.msra.mxu0 0.0
          %456 = vmatprep.subr.mxu0 0.0
          %457 = vmatpush1.xpose.msra.mxu0 0.0
          %458 = vmatprep.subr.mxu0 0.0
          %459 = vmatpush1.xpose.msra.mxu0 0.0
          %460 = vmatprep.subr.mxu0 0.0
          %461 = vmatpush1.xpose.msra.mxu0 0.0
          %462 = vmatprep.subr.mxu0 0.0
          %463 = vmatpush1.xpose.msra.mxu0 0.0
          %464 = vmatprep.subr.mxu0 0.0
          %465 = vmatpush1.xpose.msra.mxu0 0.0
          %466 = vmatprep.subr.mxu0 0.0
          %467 = vmatpush1.xpose.msra.mxu0 0.0
          %468 = vmatprep.subr.mxu0 0.0
          %469 = vmatpush1.xpose.msra.mxu0 0.0
          %470 = vmatprep.subr.mxu0 0.0
          %471 = vmatpush1.xpose.msra.mxu0 0.0
          %472 = vmatprep.subr.mxu0 0.0
          %473 = vmatpush1.xpose.msra.mxu0 0.0
          %474 = vmatprep.subr.mxu0 0.0
          %475 = vmatpush1.xpose.msra.mxu0 0.0
          %476 = vmatprep.subr.mxu0 0.0
          %477 = vmatpush1.xpose.msra.mxu0 0.0
          %478 = vmatprep.subr.mxu0 0.0
          %479 = vmatpush1.xpose.msra.mxu0 0.0
          %480 = vmatprep.subr.mxu0 0.0
          %481 = vmatpush1.xpose.msra.mxu0 0.0
          %482 = vmatprep.subr.mxu0 0.0
          %483 = vmatpush1.xpose.msra.mxu0 0.0
          %484 = vmatprep.subr.mxu0 0.0
          %485 = vmatpush1.xpose.msra.mxu0 0.0
          %486 = vmatprep.subr.mxu0 0.0
          %487 = vmatpush1.xpose.msra.mxu0 0.0
          %488 = vmatprep.subr.mxu0 0.0
          %489 = vmatpush1.xpose.msra.mxu0 0.0
          %490 = vmatprep.subr.mxu0 0.0
          %491 = vmatpush1.xpose.msra.mxu0 0.0
          %492 = vmatprep.subr.mxu0 0.0
          %493 = vmatpush1.xpose.msra.mxu0 0.0
          %494 = vmatprep.subr.mxu0 0.0
          %495 = vmatpush1.xpose.msra.mxu0 0.0
          %496 = vmatprep.subr.mxu0 0.0
          %497 = vmatpush1.xpose.msra.mxu0 0.0
          %498 = vmatprep.subr.mxu0 0.0
          %499 = vmatpush1.xpose.msra.mxu0 0.0
          %500 = vmatprep.subr.mxu0 0.0
          %501 = vmatpush1.xpose.msra.mxu0 0.0
          %502 = vmatprep.subr.mxu0 0.0
          %503 = vmatpush1.xpose.msra.mxu0 0.0
          %504 = vmatprep.subr.mxu0 0.0
          %505 = vmatpush1.xpose.msra.mxu0 0.0
          %506 = vmatprep.subr.mxu0 0.0
          %507 = vmatpush1.xpose.msra.mxu0 0.0
          %508 = vmatprep.subr.mxu0 0.0
          %509 = vmatpush1.xpose.msra.mxu0 0.0
          %510 = vmatprep.subr.mxu0 0.0
          %511 = vmatpush1.xpose.msra.mxu0 0.0
          %512 = vmatprep.mubr.f32.mxu0 0.0
          %v513 = vand.u32 %v362, 4294901760
          %514 = vmatmul.mubr.f32.gmra.mrb[0].mxu0 %v513
          %v515 = vpop.f32.mrb[0].mxu0
          %v516 = vadd.f32 %v440, %v515
          %v517 = vpop.f32.mrb[0].mxu0
          %518 = vdwg.mxu0
          %519 = vmatprep.subr.mxu0 0.0
          %v520 = vand.u32 %v365, 4294901760
          %v521 = vsub.f32 %v365, %v520
          %522 = vmatpush1.xpose.msra.mxu0 %v521
          %523 = vmatprep.subr.mxu0 0.0
          %524 = vmatpush1.xpose.msra.mxu0 0.0
          %525 = vmatprep.subr.mxu0 0.0
          %526 = vmatpush1.xpose.msra.mxu0 0.0
          %527 = vmatprep.subr.mxu0 0.0
          %528 = vmatpush1.xpose.msra.mxu0 0.0
          %529 = vmatprep.subr.mxu0 0.0
          %530 = vmatpush1.xpose.msra.mxu0 0.0
          %531 = vmatprep.subr.mxu0 0.0
          %532 = vmatpush1.xpose.msra.mxu0 0.0
          %533 = vmatprep.subr.mxu0 0.0
          %534 = vmatpush1.xpose.msra.mxu0 0.0
          %535 = vmatprep.subr.mxu0 0.0
          %536 = vmatpush1.xpose.msra.mxu0 0.0
          %537 = vmatprep.subr.mxu0 0.0
          %538 = vmatpush1.xpose.msra.mxu0 0.0
          %539 = vmatprep.subr.mxu0 0.0
          %540 = vmatpush1.xpose.msra.mxu0 0.0
          %541 = vmatprep.subr.mxu0 0.0
          %542 = vmatpush1.xpose.msra.mxu0 0.0
          %543 = vmatprep.subr.mxu0 0.0
          %544 = vmatpush1.xpose.msra.mxu0 0.0
          %545 = vmatprep.subr.mxu0 0.0
          %546 = vmatpush1.xpose.msra.mxu0 0.0
          %547 = vmatprep.subr.mxu0 0.0
          %548 = vmatpush1.xpose.msra.mxu0 0.0
          %549 = vmatprep.subr.mxu0 0.0
          %550 = vmatpush1.xpose.msra.mxu0 0.0
          %551 = vmatprep.subr.mxu0 0.0
          %552 = vmatpush1.xpose.msra.mxu0 0.0
          %553 = vmatprep.subr.mxu0 0.0
          %554 = vmatpush1.xpose.msra.mxu0 0.0
          %555 = vmatprep.subr.mxu0 0.0
          %556 = vmatpush1.xpose.msra.mxu0 0.0
          %557 = vmatprep.subr.mxu0 0.0
          %558 = vmatpush1.xpose.msra.mxu0 0.0
          %559 = vmatprep.subr.mxu0 0.0
          %560 = vmatpush1.xpose.msra.mxu0 0.0
          %561 = vmatprep.subr.mxu0 0.0
          %562 = vmatpush1.xpose.msra.mxu0 0.0
          %563 = vmatprep.subr.mxu0 0.0
          %564 = vmatpush1.xpose.msra.mxu0 0.0
          %565 = vmatprep.subr.mxu0 0.0
          %566 = vmatpush1.xpose.msra.mxu0 0.0
          %567 = vmatprep.subr.mxu0 0.0
          %568 = vmatpush1.xpose.msra.mxu0 0.0
          %569 = vmatprep.subr.mxu0 0.0
          %570 = vmatpush1.xpose.msra.mxu0 0.0
          %571 = vmatprep.subr.mxu0 0.0
          %572 = vmatpush1.xpose.msra.mxu0 0.0
          %573 = vmatprep.subr.mxu0 0.0
          %574 = vmatpush1.xpose.msra.mxu0 0.0
          %575 = vmatprep.subr.mxu0 0.0
          %576 = vmatpush1.xpose.msra.mxu0 0.0
          %577 = vmatprep.subr.mxu0 0.0
          %578 = vmatpush1.xpose.msra.mxu0 0.0
          %579 = vmatprep.subr.mxu0 0.0
          %580 = vmatpush1.xpose.msra.mxu0 0.0
          %581 = vmatprep.subr.mxu0 0.0
          %582 = vmatpush1.xpose.msra.mxu0 0.0
          %583 = vmatprep.subr.mxu0 0.0
          %584 = vmatpush1.xpose.msra.mxu0 0.0
          %585 = vmatprep.mubr.f32.mxu0 0.0
          %v586 = vand.u32 %v362, 4294901760
          %v587 = vsub.f32 %v362, %v586
          %588 = vmatmul.mubr.f32.gmra.mrb[0].mxu0 %v587
          %v589 = vpop.f32.mrb[0].mxu0
          %v590 = vadd.f32 %v516, %v589
          %v591 = vpop.f32.mrb[0].mxu0
          %592 = vdwg.mxu0
          %593 = vmatprep.subr.mxu0 0.0
          %v594 = vand.u32 %v365, 4294901760
          %595 = vmatpush1.xpose.msra.mxu0 %v594
          %596 = vmatprep.subr.mxu0 0.0
          %597 = vmatpush1.xpose.msra.mxu0 0.0
          %598 = vmatprep.subr.mxu0 0.0
          %599 = vmatpush1.xpose.msra.mxu0 0.0
          %600 = vmatprep.subr.mxu0 0.0
          %601 = vmatpush1.xpose.msra.mxu0 0.0
          %602 = vmatprep.subr.mxu0 0.0
          %603 = vmatpush1.xpose.msra.mxu0 0.0
          %604 = vmatprep.subr.mxu0 0.0
          %605 = vmatpush1.xpose.msra.mxu0 0.0
          %606 = vmatprep.subr.mxu0 0.0
          %607 = vmatpush1.xpose.msra.mxu0 0.0
          %608 = vmatprep.subr.mxu0 0.0
          %609 = vmatpush1.xpose.msra.mxu0 0.0
          %610 = vmatprep.subr.mxu0 0.0
          %611 = vmatpush1.xpose.msra.mxu0 0.0
          %612 = vmatprep.subr.mxu0 0.0
          %613 = vmatpush1.xpose.msra.mxu0 0.0
          %614 = vmatprep.subr.mxu0 0.0
          %615 = vmatpush1.xpose.msra.mxu0 0.0
          %616 = vmatprep.subr.mxu0 0.0
          %617 = vmatpush1.xpose.msra.mxu0 0.0
          %618 = vmatprep.subr.mxu0 0.0
          %619 = vmatpush1.xpose.msra.mxu0 0.0
          %620 = vmatprep.subr.mxu0 0.0
          %621 = vmatpush1.xpose.msra.mxu0 0.0
          %622 = vmatprep.subr.mxu0 0.0
          %623 = vmatpush1.xpose.msra.mxu0 0.0
          %624 = vmatprep.subr.mxu0 0.0
          %625 = vmatpush1.xpose.msra.mxu0 0.0
          %626 = vmatprep.subr.mxu0 0.0
          %627 = vmatpush1.xpose.msra.mxu0 0.0
          %628 = vmatprep.subr.mxu0 0.0
          %629 = vmatpush1.xpose.msra.mxu0 0.0
          %630 = vmatprep.subr.mxu0 0.0
          %631 = vmatpush1.xpose.msra.mxu0 0.0
          %632 = vmatprep.subr.mxu0 0.0
          %633 = vmatpush1.xpose.msra.mxu0 0.0
          %634 = vmatprep.subr.mxu0 0.0
          %635 = vmatpush1.xpose.msra.mxu0 0.0
          %636 = vmatprep.subr.mxu0 0.0
          %637 = vmatpush1.xpose.msra.mxu0 0.0
          %638 = vmatprep.subr.mxu0 0.0
          %639 = vmatpush1.xpose.msra.mxu0 0.0
          %640 = vmatprep.subr.mxu0 0.0
          %641 = vmatpush1.xpose.msra.mxu0 0.0
          %642 = vmatprep.subr.mxu0 0.0
          %643 = vmatpush1.xpose.msra.mxu0 0.0
          %644 = vmatprep.subr.mxu0 0.0
          %645 = vmatpush1.xpose.msra.mxu0 0.0
          %646 = vmatprep.subr.mxu0 0.0
          %647 = vmatpush1.xpose.msra.mxu0 0.0
          %648 = vmatprep.subr.mxu0 0.0
          %649 = vmatpush1.xpose.msra.mxu0 0.0
          %650 = vmatprep.subr.mxu0 0.0
          %651 = vmatpush1.xpose.msra.mxu0 0.0
          %652 = vmatprep.subr.mxu0 0.0
          %653 = vmatpush1.xpose.msra.mxu0 0.0
          %654 = vmatprep.subr.mxu0 0.0
          %655 = vmatpush1.xpose.msra.mxu0 0.0
          %656 = vmatprep.subr.mxu0 0.0
          %657 = vmatpush1.xpose.msra.mxu0 0.0
          %658 = vmatprep.mubr.f32.mxu0 0.0
          %v659 = vand.u32 %v362, 4294901760
          %v660 = vsub.f32 %v362, %v659
          %v661 = vand.u32 %v660, 4294901760
          %662 = vmatmul.mubr.f32.gmra.mrb[0].mxu0 %v661
          %v663 = vpop.f32.mrb[0].mxu0
          %v664 = vadd.f32 %v590, %v663
          %v665 = vpop.f32.mrb[0].mxu0
          %666 = vdwg.mxu0
          %667 = vmatprep.subr.mxu0 0.0
          %v668 = vand.u32 %v365, 4294901760
          %v669 = vsub.f32 %v365, %v668
          %v670 = vand.u32 %v669, 4294901760
          %671 = vmatpush1.xpose.msra.mxu0 %v670
          %672 = vmatprep.subr.mxu0 0.0
          %673 = vmatpush1.xpose.msra.mxu0 0.0
          %674 = vmatprep.subr.mxu0 0.0
          %675 = vmatpush1.xpose.msra.mxu0 0.0
          %676 = vmatprep.subr.mxu0 0.0
          %677 = vmatpush1.xpose.msra.mxu0 0.0
          %678 = vmatprep.subr.mxu0 0.0
          %679 = vmatpush1.xpose.msra.mxu0 0.0
          %680 = vmatprep.subr.mxu0 0.0
          %681 = vmatpush1.xpose.msra.mxu0 0.0
          %682 = vmatprep.subr.mxu0 0.0
          %683 = vmatpush1.xpose.msra.mxu0 0.0
          %684 = vmatprep.subr.mxu0 0.0
          %685 = vmatpush1.xpose.msra.mxu0 0.0
          %686 = vmatprep.subr.mxu0 0.0
          %687 = vmatpush1.xpose.msra.mxu0 0.0
          %688 = vmatprep.subr.mxu0 0.0
          %689 = vmatpush1.xpose.msra.mxu0 0.0
          %690 = vmatprep.subr.mxu0 0.0
          %691 = vmatpush1.xpose.msra.mxu0 0.0
          %692 = vmatprep.subr.mxu0 0.0
          %693 = vmatpush1.xpose.msra.mxu0 0.0
          %694 = vmatprep.subr.mxu0 0.0
          %695 = vmatpush1.xpose.msra.mxu0 0.0
          %696 = vmatprep.subr.mxu0 0.0
          %697 = vmatpush1.xpose.msra.mxu0 0.0
          %698 = vmatprep.subr.mxu0 0.0
          %699 = vmatpush1.xpose.msra.mxu0 0.0
          %700 = vmatprep.subr.mxu0 0.0
          %701 = vmatpush1.xpose.msra.mxu0 0.0
          %702 = vmatprep.subr.mxu0 0.0
          %703 = vmatpush1.xpose.msra.mxu0 0.0
          %704 = vmatprep.subr.mxu0 0.0
          %705 = vmatpush1.xpose.msra.mxu0 0.0
          %706 = vmatprep.subr.mxu0 0.0
          %707 = vmatpush1.xpose.msra.mxu0 0.0
          %708 = vmatprep.subr.mxu0 0.0
          %709 = vmatpush1.xpose.msra.mxu0 0.0
          %710 = vmatprep.subr.mxu0 0.0
          %711 = vmatpush1.xpose.msra.mxu0 0.0
          %712 = vmatprep.subr.mxu0 0.0
          %713 = vmatpush1.xpose.msra.mxu0 0.0
          %714 = vmatprep.subr.mxu0 0.0
          %715 = vmatpush1.xpose.msra.mxu0 0.0
          %716 = vmatprep.subr.mxu0 0.0
          %717 = vmatpush1.xpose.msra.mxu0 0.0
          %718 = vmatprep.subr.mxu0 0.0
          %719 = vmatpush1.xpose.msra.mxu0 0.0
          %720 = vmatprep.subr.mxu0 0.0
          %721 = vmatpush1.xpose.msra.mxu0 0.0
          %722 = vmatprep.subr.mxu0 0.0
          %723 = vmatpush1.xpose.msra.mxu0 0.0
          %724 = vmatprep.subr.mxu0 0.0
          %725 = vmatpush1.xpose.msra.mxu0 0.0
          %726 = vmatprep.subr.mxu0 0.0
          %727 = vmatpush1.xpose.msra.mxu0 0.0
          %728 = vmatprep.subr.mxu0 0.0
          %729 = vmatpush1.xpose.msra.mxu0 0.0
          %730 = vmatprep.subr.mxu0 0.0
          %731 = vmatpush1.xpose.msra.mxu0 0.0
          %732 = vmatprep.subr.mxu0 0.0
          %733 = vmatpush1.xpose.msra.mxu0 0.0
          %734 = vmatprep.mubr.f32.mxu0 0.0
          %v735 = vand.u32 %v362, 4294901760
          %736 = vmatmul.mubr.f32.gmra.mrb[0].mxu0 %v735
          %v737 = vpop.f32.mrb[0].mxu0
          %v738 = vadd.f32 %v664, %v737
          %v739 = vpop.f32.mrb[0].mxu0
          %740 = vdwg.mxu0
          %741 = vmatprep.subr.mxu0 0.0
          %v742 = vand.u32 %v365, 4294901760
          %743 = vmatpush1.xpose.msra.mxu0 %v742
          %744 = vmatprep.subr.mxu0 0.0
          %745 = vmatpush1.xpose.msra.mxu0 0.0
          %746 = vmatprep.subr.mxu0 0.0
          %747 = vmatpush1.xpose.msra.mxu0 0.0
          %748 = vmatprep.subr.mxu0 0.0
          %749 = vmatpush1.xpose.msra.mxu0 0.0
          %750 = vmatprep.subr.mxu0 0.0
          %751 = vmatpush1.xpose.msra.mxu0 0.0
          %752 = vmatprep.subr.mxu0 0.0
          %753 = vmatpush1.xpose.msra.mxu0 0.0
          %754 = vmatprep.subr.mxu0 0.0
          %755 = vmatpush1.xpose.msra.mxu0 0.0
          %756 = vmatprep.subr.mxu0 0.0
          %757 = vmatpush1.xpose.msra.mxu0 0.0
          %758 = vmatprep.subr.mxu0 0.0
          %759 = vmatpush1.xpose.msra.mxu0 0.0
          %760 = vmatprep.subr.mxu0 0.0
          %761 = vmatpush1.xpose.msra.mxu0 0.0
          %762 = vmatprep.subr.mxu0 0.0
          %763 = vmatpush1.xpose.msra.mxu0 0.0
          %764 = vmatprep.subr.mxu0 0.0
          %765 = vmatpush1.xpose.msra.mxu0 0.0
          %766 = vmatprep.subr.mxu0 0.0
          %767 = vmatpush1.xpose.msra.mxu0 0.0
          %768 = vmatprep.subr.mxu0 0.0
          %769 = vmatpush1.xpose.msra.mxu0 0.0
          %770 = vmatprep.subr.mxu0 0.0
          %771 = vmatpush1.xpose.msra.mxu0 0.0
          %772 = vmatprep.subr.mxu0 0.0
          %773 = vmatpush1.xpose.msra.mxu0 0.0
          %774 = vmatprep.subr.mxu0 0.0
          %775 = vmatpush1.xpose.msra.mxu0 0.0
          %776 = vmatprep.subr.mxu0 0.0
          %777 = vmatpush1.xpose.msra.mxu0 0.0
          %778 = vmatprep.subr.mxu0 0.0
          %779 = vmatpush1.xpose.msra.mxu0 0.0
          %780 = vmatprep.subr.mxu0 0.0
          %781 = vmatpush1.xpose.msra.mxu0 0.0
          %782 = vmatprep.subr.mxu0 0.0
          %783 = vmatpush1.xpose.msra.mxu0 0.0
          %784 = vmatprep.subr.mxu0 0.0
          %785 = vmatpush1.xpose.msra.mxu0 0.0
          %786 = vmatprep.subr.mxu0 0.0
          %787 = vmatpush1.xpose.msra.mxu0 0.0
          %788 = vmatprep.subr.mxu0 0.0
          %789 = vmatpush1.xpose.msra.mxu0 0.0
          %790 = vmatprep.subr.mxu0 0.0
          %791 = vmatpush1.xpose.msra.mxu0 0.0
          %792 = vmatprep.subr.mxu0 0.0
          %793 = vmatpush1.xpose.msra.mxu0 0.0
          %794 = vmatprep.subr.mxu0 0.0
          %795 = vmatpush1.xpose.msra.mxu0 0.0
          %796 = vmatprep.subr.mxu0 0.0
          %797 = vmatpush1.xpose.msra.mxu0 0.0
          %798 = vmatprep.subr.mxu0 0.0
          %799 = vmatpush1.xpose.msra.mxu0 0.0
          %800 = vmatprep.subr.mxu0 0.0
          %801 = vmatpush1.xpose.msra.mxu0 0.0
          %802 = vmatprep.subr.mxu0 0.0
          %803 = vmatpush1.xpose.msra.mxu0 0.0
          %804 = vmatprep.subr.mxu0 0.0
          %805 = vmatpush1.xpose.msra.mxu0 0.0
          %806 = vmatprep.mubr.f32.mxu0 0.0
          %v807 = vand.u32 %v362, 4294901760
          %808 = vmatmul.mubr.f32.gmra.mrb[0].mxu0 %v807
          %v809 = vpop.f32.mrb[0].mxu0
          %v810 = vadd.f32 %v738, %v809
          %v811 = vpop.f32.mrb[0].mxu0
          %812 = vdwg.mxu0
          %p813 = scmp.eq.s32.totalorder %s24, 0
          %s814 = sld [smem:[#allocation4]]
          %s815 = scalar_select %p813, %s814, 0.0
          %v816 = vstv %s815
          %v817 = vadd.f32 %v810, %v816
          %vm818 = vcmask 57344
          %819 = vst.msk [vmem:[#allocation8] sm:$0x1] %vm818, %v817
        $region56: #{tpu_custom_call.1} parent=39 // pred_fallthru
          _
        // Predicated region
        $region57: #{tpu_custom_call.1} parent=39 // pred_check
          %p820 = pneg %p185
        $region58: #{tpu_custom_call.1} parent=39 // pred_check_branch
          %822 = sbr.rel (%p820) target = $region60
        $region59: #{tpu_custom_call.1} parent=39 // pred_region
          %s824 = ssub.s32 16, 16
          %825 = vsyncadd [#allocation7], %s824
          %s826 = sadd.s32 %s26, %s24
          %s827 = smul.addr %s826, 16
          %s828 = scalar_lea.hbm %s5, %s827
          %s830 = sshll.u32 [#allocation8], 4
          %s831 = int_to_ptr.vmem [resolvable:$true] %s830
          %833 = dma.vmem_to_hbm [thread:$0]  %s831, 16, %s828, [#allocation7]
        $region60: #{tpu_custom_call.1} parent=39 // pred_fallthru
          _
        // Predicated region
        $region61: #{tpu_custom_call.1} parent=39 // pred_check
          %p834 = pneg %p185
        $region62: #{tpu_custom_call.1} parent=39 // pred_check_branch
          %836 = sbr.rel (%p834) target = $region64
        $region63: #{tpu_custom_call.1} parent=39 // pred_region
          %837 = dma.done [#allocation7], 16
        $region64: #{tpu_custom_call.1} parent=39 // pred_fallthru
          _
      $region40: #{tpu_custom_call.1} parent=5 // pred_fallthru
        _
      %p838 = scmp.le.s32.totalorder 2, %s14
      // Predicated region
      $region65: #{tpu_custom_call.1} parent=5 // pred_check
        %p839 = pneg %p838
      $region66: #{tpu_custom_call.1} parent=5 // pred_check_branch
        %841 = sbr.rel (%p839) target = $region68
      $region67: #{tpu_custom_call.1} parent=5 // pred_region
        %s842 = ssub.s32 %s14, 2
      $region68: #{tpu_custom_call.1} parent=5 // pred_fallthru
        _
    $region6: #{tpu_custom_call.1} parent=1 // loop_footer
      %s18 = sadd.s32 1, %s14
    $region7: #{tpu_custom_call.1} parent=1 // loop_footer_branch
      %13 = sbr.rel target = $region3
    $region8: #{tpu_custom_call.1} parent=1 // loop_exit
      _
    %843 = vsyncpa [#allocation6], 1
    %s844 = scalar_lea.sflag [#allocation6], 1
    %845 = vsyncpa %s844, 1
    %846 = vsyncpa [#allocation7], 1
    %s847 = scalar_lea.sflag [#allocation7], 1
    %848 = vsyncpa %s847, 1

</llo_original>
